<compile_context>
chip_gen: v7x
topology: tpu7x:2x2x1
jax: 0.10.0
libtpu: 0.0.40
codegen_flags: <defaults>
</compile_context>

<pallas_src>
import functools

import jax
import jax.numpy as jnp
from jax import lax
from jax.experimental import pallas as pl
from jax.experimental.pallas import tpu as pltpu


def _round_up(x, m):
    return ((x + m - 1) // m) * m


def _bpr_loss_sel2_kernel(*refs, C, block_rows, total_rows, has_weight,
                          needs_mask):
    if has_weight:
        (pos_ref, neg_ref, pos_sel_ref, neg_sel_ref,
         pos_tag_ref, neg_tag_ref, w_ref, out_ref) = refs
    else:
        (pos_ref, neg_ref, pos_sel_ref, neg_sel_ref,
         pos_tag_ref, neg_tag_ref, out_ref) = refs
        w_ref = None

    pos = pos_ref[...].astype(jnp.float32)
    neg = neg_ref[...].astype(jnp.float32)
    pos_sel = pos_sel_ref[...].astype(jnp.float32)
    neg_sel = neg_sel_ref[...].astype(jnp.float32)
    pos_tag = pos_tag_ref[...].astype(jnp.float32)
    neg_tag = neg_tag_ref[...].astype(jnp.float32)

    diff = pos - neg

    # -logsigmoid(x) == softplus(-x), numerically stable form.
    neg_logsig = jnp.maximum(-diff, 0.0) + jnp.log1p(jnp.exp(-jnp.abs(diff)))

    tag_prod = pos_tag * neg_tag
    if has_weight:
        tag_prod = tag_prod * w_ref[...].astype(jnp.float32)

    # BCEWithLogits(z, t) per-element = max(z, 0) - z*t + log1p(exp(-|z|)).
    def bce_elem(z, t):
        return jnp.maximum(z, 0.0) - z * t + jnp.log1p(jnp.exp(-jnp.abs(z)))

    # Single fused per-element loss; one reduction instead of three means.
    elem = (tag_prod * neg_logsig
            + C * bce_elem(pos_sel + diff, pos_tag)
            + C * bce_elem(neg_sel + diff, neg_tag))

    if needs_mask:
        row0 = pl.program_id(0) * block_rows
        row_idx = row0 + lax.broadcasted_iota(jnp.int32, (block_rows, 128), 0)
        elem = jnp.where(row_idx < total_rows, elem, 0.0)

    # Fold (block_rows, 128) -> (8, 128) with static, unrolled vreg adds
    # (pure VALU; the expensive cross-lane reduce is deferred to the wrapper).
    acc = elem[0:8, :]
    for j in range(1, block_rows // 8):
        acc = acc + elem[j * 8:(j + 1) * 8, :]

    out_ref[...] = acc


def bpr_loss_sel2(pos_score, neg_score, pos_sel_score, neg_sel_score,
                  pos_sel_tag, neg_sel_tag, *, C=1.0, weight=None):
    """Pallas implementation of BPRLoss_sel2.forward (weight=None and tensor
    weight paths)."""
    n = pos_score.shape[0]
    assert n % 128 == 0, "this kernel requires N to be a multiple of 128"
    rows = n // 128

    # Tile: up to 512 rows (512x128 f32 = 256 KiB/input tile; ~3 MiB total
    # with double-buffering for 6-7 inputs), always a multiple of 8 sublanes.
    block_rows = min(512, _round_up(rows, 8))
    padded_rows = _round_up(rows, block_rows)
    num_blocks = padded_rows // block_rows
    needs_mask = padded_rows != rows

    def to2d(x):
        x = x.reshape(rows, 128)  # keep caller dtype; kernel upcasts to f32
        if needs_mask:
            x = jnp.pad(x, ((0, padded_rows - rows), (0, 0)))
        return x

    inputs = [pos_score, neg_score, pos_sel_score, neg_sel_score,
              pos_sel_tag, neg_sel_tag]
    has_weight = weight is not None
    if has_weight:
        # Pass weight as a real operand (broadcast to (N,)), not a traced
        # constant baked into the kernel.
        w = jnp.broadcast_to(
            jnp.asarray(weight, dtype=jnp.float32).reshape(-1), (n,))
        inputs.append(w)

    args = [to2d(a) for a in inputs]

    kernel = functools.partial(
        _bpr_loss_sel2_kernel, C=float(C), block_rows=block_rows,
        total_rows=rows, has_weight=has_weight, needs_mask=needs_mask)

    in_spec = pl.BlockSpec((block_rows, 128), lambda i: (i, 0))
    grid_spec = pltpu.PrefetchScalarGridSpec(
        num_scalar_prefetch=0,
        grid=(num_blocks,),
        in_specs=[in_spec] * len(args),
        out_specs=pl.BlockSpec((8, 128), lambda i: (i, 0)),
    )

    partials = pl.pallas_call(
        kernel,
        out_shape=jax.ShapeDtypeStruct((num_blocks * 8, 128), jnp.float32),
        grid_spec=grid_spec,
        compiler_params=pltpu.CompilerParams(
            dimension_semantics=("parallel",)),
    )(*args)

    # Tiny final reduce + single 1/N scale (all three original means share N).
    return jnp.sum(partials) * (1.0 / n)


def _reference(pos, neg, pos_sel, neg_sel, pos_tag, neg_tag, C=1.0,
               weight=None):
    diff = pos - neg
    neg_logsig = jnp.maximum(-diff, 0.0) + jnp.log1p(jnp.exp(-jnp.abs(diff)))
    tag_prod = pos_tag * neg_tag
    if weight is not None:
        tag_prod = tag_prod * weight
    bpr_val = jnp.mean(tag_prod * neg_logsig)

    def bce(z, t):
        return jnp.mean(jnp.maximum(z, 0.0) - z * t
                        + jnp.log1p(jnp.exp(-jnp.abs(z))))

    return bpr_val + C * bce(pos_sel + diff, pos_tag) + C * bce(
        neg_sel + diff, neg_tag)


if __name__ == "__main__":
    key = jax.random.PRNGKey(0)
    N = 1024  # small batch of 1-D scores; (N//128, 128) = (8, 128) slab
    k1, k2, k3, k4, k5, k6, k7 = jax.random.split(key, 7)

    pos_score = jax.random.normal(k1, (N,), dtype=jnp.float32)
    neg_score = jax.random.normal(k2, (N,), dtype=jnp.float32)
    pos_sel_score = jax.random.normal(k3, (N,), dtype=jnp.float32)
    neg_sel_score = jax.random.normal(k4, (N,), dtype=jnp.float32)
    pos_sel_tag = jax.random.bernoulli(k5, 0.7, (N,)).astype(jnp.float32)
    neg_sel_tag = jax.random.bernoulli(k6, 0.3, (N,)).astype(jnp.float32)
    weight = jax.random.uniform(k7, (N,), dtype=jnp.float32, minval=0.5,
                                maxval=1.5)

    # weight=None path (default in the PyTorch module).
    loss = bpr_loss_sel2(pos_score, neg_score, pos_sel_score, neg_sel_score,
                         pos_sel_tag, neg_sel_tag, C=1.0, weight=None)
    loss = jax.block_until_ready(loss)
    ref = _reference(pos_score, neg_score, pos_sel_score, neg_sel_score,
                     pos_sel_tag, neg_sel_tag, C=1.0)
    assert jnp.allclose(loss, ref, rtol=1e-5, atol=1e-5), (loss, ref)

    # weight-tensor path.
    loss_w = bpr_loss_sel2(pos_score, neg_score, pos_sel_score, neg_sel_score,
                           pos_sel_tag, neg_sel_tag, C=1.0, weight=weight)
    loss_w = jax.block_until_ready(loss_w)
    ref_w = _reference(pos_score, neg_score, pos_sel_score, neg_sel_score,
                       pos_sel_tag, neg_sel_tag, C=1.0, weight=weight)
    assert jnp.allclose(loss_w, ref_w, rtol=1e-5, atol=1e-5), (loss_w, ref_w)

    print("KERNEL_OK")
</pallas_src>

<mosaic_0001>
module attributes {stable_mosaic.version = 11 : i64} {
  func.func @_bpr_loss_sel2_kernel(%arg0: i32, %arg1: memref<8x128xf32, #tpu.memory_space<vmem>>, %arg2: memref<8x128xf32, #tpu.memory_space<vmem>>, %arg3: memref<8x128xf32, #tpu.memory_space<vmem>>, %arg4: memref<8x128xf32, #tpu.memory_space<vmem>>, %arg5: memref<8x128xf32, #tpu.memory_space<vmem>>, %arg6: memref<8x128xf32, #tpu.memory_space<vmem>>, %arg7: memref<8x128xf32, #tpu.memory_space<vmem>>) attributes {dimension_semantics = [#tpu.dimension_semantics<parallel>], iteration_bounds = array<i64: 1>, scalar_prefetch = 0 : i64, scratch_operands = 0 : i64, tpu.core_type = #tpu.core_type<tc>, window_params = [{transform_indices = @transform_0, window_bounds = array<i64: 8, 128>}, {transform_indices = @transform_1, window_bounds = array<i64: 8, 128>}, {transform_indices = @transform_2, window_bounds = array<i64: 8, 128>}, {transform_indices = @transform_3, window_bounds = array<i64: 8, 128>}, {transform_indices = @transform_4, window_bounds = array<i64: 8, 128>}, {transform_indices = @transform_5, window_bounds = array<i64: 8, 128>}, {transform_indices = @transform_6, window_bounds = array<i64: 8, 128>}]} {
    %c0 = arith.constant 0 : index
    %c0_0 = arith.constant 0 : index
    %0 = vector.load %arg1[%c0, %c0_0] : memref<8x128xf32, #tpu.memory_space<vmem>>, vector<8x128xf32>
    %c0_1 = arith.constant 0 : index
    %c0_2 = arith.constant 0 : index
    %1 = vector.load %arg2[%c0_1, %c0_2] : memref<8x128xf32, #tpu.memory_space<vmem>>, vector<8x128xf32>
    %c0_3 = arith.constant 0 : index
    %c0_4 = arith.constant 0 : index
    %2 = vector.load %arg3[%c0_3, %c0_4] : memref<8x128xf32, #tpu.memory_space<vmem>>, vector<8x128xf32>
    %c0_5 = arith.constant 0 : index
    %c0_6 = arith.constant 0 : index
    %3 = vector.load %arg4[%c0_5, %c0_6] : memref<8x128xf32, #tpu.memory_space<vmem>>, vector<8x128xf32>
    %c0_7 = arith.constant 0 : index
    %c0_8 = arith.constant 0 : index
    %4 = vector.load %arg5[%c0_7, %c0_8] : memref<8x128xf32, #tpu.memory_space<vmem>>, vector<8x128xf32>
    %c0_9 = arith.constant 0 : index
    %c0_10 = arith.constant 0 : index
    %5 = vector.load %arg6[%c0_9, %c0_10] : memref<8x128xf32, #tpu.memory_space<vmem>>, vector<8x128xf32>
    %6 = arith.subf %0, %1 : vector<8x128xf32>
    %cst = arith.constant 0.000000e+00 : f32
    %7 = vector.broadcast %cst : f32 to vector<8x128xf32>
    %8 = arith.subf %7, %6 : vector<8x128xf32>
    %cst_11 = arith.constant 0.000000e+00 : f32
    %9 = vector.broadcast %cst_11 : f32 to vector<8x128xf32>
    %10 = arith.maximumf %8, %9 : vector<8x128xf32>
    %11 = math.absf %6 : vector<8x128xf32>
    %cst_12 = arith.constant 0.000000e+00 : f32
    %12 = vector.broadcast %cst_12 : f32 to vector<8x128xf32>
    %13 = arith.subf %12, %11 : vector<8x128xf32>
    %14 = math.exp %13 : vector<8x128xf32>
    %15 = math.log1p %14 : vector<8x128xf32>
    %16 = arith.addf %10, %15 : vector<8x128xf32>
    %17 = arith.mulf %4, %5 : vector<8x128xf32>
    %18 = arith.mulf %17, %16 : vector<8x128xf32>
    %19 = arith.addf %2, %6 : vector<8x128xf32>
    %cst_13 = arith.constant 0.000000e+00 : f32
    %20 = vector.broadcast %cst_13 : f32 to vector<8x128xf32>
    %21 = arith.maximumf %19, %20 : vector<8x128xf32>
    %22 = arith.mulf %19, %4 : vector<8x128xf32>
    %23 = arith.subf %21, %22 : vector<8x128xf32>
    %24 = math.absf %19 : vector<8x128xf32>
    %cst_14 = arith.constant 0.000000e+00 : f32
    %25 = vector.broadcast %cst_14 : f32 to vector<8x128xf32>
    %26 = arith.subf %25, %24 : vector<8x128xf32>
    %27 = math.exp %26 : vector<8x128xf32>
    %28 = math.log1p %27 : vector<8x128xf32>
    %29 = arith.addf %23, %28 : vector<8x128xf32>
    %cst_15 = arith.constant 1.000000e+00 : f32
    %30 = vector.broadcast %cst_15 : f32 to vector<8x128xf32>
    %31 = arith.mulf %30, %29 : vector<8x128xf32>
    %32 = arith.addf %18, %31 : vector<8x128xf32>
    %33 = arith.addf %3, %6 : vector<8x128xf32>
    %cst_16 = arith.constant 0.000000e+00 : f32
    %34 = vector.broadcast %cst_16 : f32 to vector<8x128xf32>
    %35 = arith.maximumf %33, %34 : vector<8x128xf32>
    %36 = arith.mulf %33, %5 : vector<8x128xf32>
    %37 = arith.subf %35, %36 : vector<8x128xf32>
    %38 = math.absf %33 : vector<8x128xf32>
    %cst_17 = arith.constant 0.000000e+00 : f32
    %39 = vector.broadcast %cst_17 : f32 to vector<8x128xf32>
    %40 = arith.subf %39, %38 : vector<8x128xf32>
    %41 = math.exp %40 : vector<8x128xf32>
    %42 = math.log1p %41 : vector<8x128xf32>
    %43 = arith.addf %37, %42 : vector<8x128xf32>
    %cst_18 = arith.constant 1.000000e+00 : f32
    %44 = vector.broadcast %cst_18 : f32 to vector<8x128xf32>
    %45 = arith.mulf %44, %43 : vector<8x128xf32>
    %46 = arith.addf %32, %45 : vector<8x128xf32>
    %c0_19 = arith.constant 0 : index
    %c0_20 = arith.constant 0 : index
    %47 = vector.load %arg7[%c0_19, %c0_20] : memref<8x128xf32, #tpu.memory_space<vmem>>, vector<8x128xf32>
    tpu.vector_store %arg7[%c0_19, %c0_20], %46 {strides = array<i32>} : memref<8x128xf32, #tpu.memory_space<vmem>>, vector<8x128xf32>,
    return
  }
  func.func @transform_0(%arg0: i32) -> (i32, i32) {
    %c0_i32 = arith.constant 0 : i32
    %c0_i32_0 = arith.constant 0 : i32
    return %arg0, %c0_i32 : i32, i32
  }
  func.func @transform_1(%arg0: i32) -> (i32, i32) {
    %c0_i32 = arith.constant 0 : i32
    %c0_i32_0 = arith.constant 0 : i32
    return %arg0, %c0_i32 : i32, i32
  }
  func.func @transform_2(%arg0: i32) -> (i32, i32) {
    %c0_i32 = arith.constant 0 : i32
    %c0_i32_0 = arith.constant 0 : i32
    return %arg0, %c0_i32 : i32, i32
  }
  func.func @transform_3(%arg0: i32) -> (i32, i32) {
    %c0_i32 = arith.constant 0 : i32
    %c0_i32_0 = arith.constant 0 : i32
    return %arg0, %c0_i32 : i32, i32
  }
  func.func @transform_4(%arg0: i32) -> (i32, i32) {
    %c0_i32 = arith.constant 0 : i32
    %c0_i32_0 = arith.constant 0 : i32
    return %arg0, %c0_i32 : i32, i32
  }
  func.func @transform_5(%arg0: i32) -> (i32, i32) {
    %c0_i32 = arith.constant 0 : i32
    %c0_i32_0 = arith.constant 0 : i32
    return %arg0, %c0_i32 : i32, i32
  }
  func.func @transform_6(%arg0: i32) -> (i32, i32) {
    %c0_i32 = arith.constant 0 : i32
    %c0_i32_0 = arith.constant 0 : i32
    return %arg0, %c0_i32 : i32, i32
  }
}

</mosaic_0001>

<llo_original>
// kernel: tpu_custom_call.1
$region0: #{tpu_custom_call.1}
  #allocation0 [shape = 'u32[]', space=smem, size = 0x4, offset = 0x4, fixed_abs, tag = 'smem constant byte address 0x4 - core index']
  #allocation1 [shape = 'u32[144,128]{1,0:T(1,128)}', space=vmem, size = 0x12000, scoped, tag = 'internal scratch']
  %s0 = inlined_call_operand.hbm [shape: f32[8,128], index: 0, kind: input, shape index: {}]
  %s1 = inlined_call_operand.hbm [shape: f32[8,128], index: 1, kind: input, shape index: {}]
  %s2 = inlined_call_operand.hbm [shape: f32[8,128], index: 2, kind: input, shape index: {}]
  %s3 = inlined_call_operand.vmem [shape: f32[8,128], index: 3, kind: input, shape index: {}]
  %s4 = inlined_call_operand.hbm [shape: f32[8,128], index: 4, kind: input, shape index: {}]
  %s5 = inlined_call_operand.vmem [shape: f32[8,128], index: 5, kind: input, shape index: {}]
  %s6 = inlined_call_operand.hbm [shape: f32[8,128], index: 6, kind: output, shape index: {}]
  %s7 = sld [smem:[#allocation0]]
  $region50: #{tpu_custom_call.1} parent=0
    _
  %s9 = ssub.s32 1, %s7
  %s10 = scalar_select 0, %s9, %s7
  $region1: #{tpu_custom_call.1} parent=0
    #allocation2 [shape = 'u8[4096]{0}', space=vmem, size = 0x1000, scoped, tag = 'input window, operand 0, single buffered']
    #allocation3 [shape = 's32[1]{0}', space=sflag, size = 0x4, scoped, tag = 'scoped memory for tpu_custom_call.1']
    #allocation4 [shape = 's32[1]{0}', space=sflag, size = 0x4, scoped, tag = 'scoped memory for tpu_custom_call.1']
    #allocation5 [shape = 'u8[4096]{0}', space=vmem, size = 0x1000, scoped, tag = 'input window, operand 1, single buffered']
    #allocation6 [shape = 's32[1]{0}', space=sflag, size = 0x4, scoped, tag = 'scoped memory for tpu_custom_call.1']
    #allocation7 [shape = 'u8[4096]{0}', space=vmem, size = 0x1000, scoped, tag = 'input window, operand 2, single buffered']
    #allocation8 [shape = 'u8[4096]{0}', space=vmem, size = 0x1000, scoped, tag = 'input window, operand 4, single buffered']
    #allocation9 [shape = 's32[1]{0}', space=sflag, size = 0x4, scoped, tag = 'scoped memory for tpu_custom_call.1']
    #allocation10 [shape = 'u8[4096]{0}', space=vmem, size = 0x1000, scoped, tag = 'output window, operand 0, single buffered']
    %11 = vsyncpa [#allocation3], 0
    %12 = vsyncpa [#allocation6], 0
    %13 = vsyncpa [#allocation9], 0
    %14 = vsyncpa [#allocation4], 0
    // Predicated region
    $region2: #{tpu_custom_call.1} parent=1 // pred_check
      _
    $region3: #{tpu_custom_call.1} parent=1 // pred_check_branch
      %16 = sbr.rel (0) target = $region5
    $region4: #{tpu_custom_call.1} parent=1 // pred_region
      %s18 = ssub.s32 128, 128
      %19 = vsyncadd [#allocation3], %s18
      %s21 = sshll.u32 [#allocation2], 4
      %s22 = int_to_ptr.vmem [resolvable:$true] %s21
      %24 = dma.hbm_to_vmem [thread:$0]  %s0, 128, %s22, [#allocation3]
    $region5: #{tpu_custom_call.1} parent=1 // pred_fallthru
      _
    // Predicated region
    $region6: #{tpu_custom_call.1} parent=1 // pred_check
      _
    $region7: #{tpu_custom_call.1} parent=1 // pred_check_branch
      %26 = sbr.rel (0) target = $region9
    $region8: #{tpu_custom_call.1} parent=1 // pred_region
      %s28 = ssub.s32 128, 128
      %29 = vsyncadd [#allocation6], %s28
      %s31 = sshll.u32 [#allocation5], 4
      %s32 = int_to_ptr.vmem [resolvable:$true] %s31
      %34 = dma.hbm_to_vmem [thread:$0]  %s1, 128, %s32, [#allocation6]
    $region9: #{tpu_custom_call.1} parent=1 // pred_fallthru
      _
    // Predicated region
    $region10: #{tpu_custom_call.1} parent=1 // pred_check
      _
    $region11: #{tpu_custom_call.1} parent=1 // pred_check_branch
      %36 = sbr.rel (0) target = $region13
    $region12: #{tpu_custom_call.1} parent=1 // pred_region
      %s38 = ssub.s32 128, 128
      %39 = vsyncadd [#allocation6], %s38
      %s41 = sshll.u32 [#allocation7], 4
      %s42 = int_to_ptr.vmem [resolvable:$true] %s41
      %44 = dma.hbm_to_vmem [thread:$0]  %s2, 128, %s42, [#allocation6]
    $region13: #{tpu_custom_call.1} parent=1 // pred_fallthru
      _
    // Predicated region
    $region14: #{tpu_custom_call.1} parent=1 // pred_check
      _
    $region15: #{tpu_custom_call.1} parent=1 // pred_check_branch
      %46 = sbr.rel (0) target = $region17
    $region16: #{tpu_custom_call.1} parent=1 // pred_region
      _
    $region17: #{tpu_custom_call.1} parent=1 // pred_fallthru
      _
    // Predicated region
    $region18: #{tpu_custom_call.1} parent=1 // pred_check
      _
    $region19: #{tpu_custom_call.1} parent=1 // pred_check_branch
      %48 = sbr.rel (0) target = $region21
    $region20: #{tpu_custom_call.1} parent=1 // pred_region
      %s50 = ssub.s32 128, 128
      %51 = vsyncadd [#allocation9], %s50
      %s53 = sshll.u32 [#allocation8], 4
      %s54 = int_to_ptr.vmem [resolvable:$true] %s53
      %56 = dma.hbm_to_vmem [thread:$0]  %s4, 128, %s54, [#allocation9]
    $region21: #{tpu_custom_call.1} parent=1 // pred_fallthru
      _
    // Predicated region
    $region22: #{tpu_custom_call.1} parent=1 // pred_check
      _
    $region23: #{tpu_custom_call.1} parent=1 // pred_check_branch
      %58 = sbr.rel (0) target = $region25
    $region24: #{tpu_custom_call.1} parent=1 // pred_region
      _
    $region25: #{tpu_custom_call.1} parent=1 // pred_fallthru
      _
    // Predicated region
    $region26: #{tpu_custom_call.1} parent=1 // pred_check
      _
    $region27: #{tpu_custom_call.1} parent=1 // pred_check_branch
      %60 = sbr.rel (0) target = $region29
    $region28: #{tpu_custom_call.1} parent=1 // pred_region
      %61 = dma.done [#allocation3], 128
    $region29: #{tpu_custom_call.1} parent=1 // pred_fallthru
      _
    // Predicated region
    $region30: #{tpu_custom_call.1} parent=1 // pred_check
      _
    $region31: #{tpu_custom_call.1} parent=1 // pred_check_branch
      %63 = sbr.rel (0) target = $region33
    $region32: #{tpu_custom_call.1} parent=1 // pred_region
      %64 = dma.done [#allocation6], 128
    $region33: #{tpu_custom_call.1} parent=1 // pred_fallthru
      _
    // Predicated region
    $region34: #{tpu_custom_call.1} parent=1 // pred_check
      _
    $region35: #{tpu_custom_call.1} parent=1 // pred_check_branch
      %66 = sbr.rel (0) target = $region37
    $region36: #{tpu_custom_call.1} parent=1 // pred_region
      %67 = dma.done [#allocation6], 128
    $region37: #{tpu_custom_call.1} parent=1 // pred_fallthru
      _
    // Predicated region
    $region38: #{tpu_custom_call.1} parent=1 // pred_check
      _
    $region39: #{tpu_custom_call.1} parent=1 // pred_check_branch
      %69 = sbr.rel (0) target = $region41
    $region40: #{tpu_custom_call.1} parent=1 // pred_region
      %70 = dma.done [#allocation9], 128
    $region41: #{tpu_custom_call.1} parent=1 // pred_fallthru
      _
    %v71 = vld [vmem:[#allocation2] sm:$0xff]
    %v72 = vld [vmem:[#allocation5] sm:$0xff]
    %v73 = vld [vmem:[#allocation7] sm:$0xff]
    %v74 = vld [vmem:[%s3] sm:$0xff]
    %v75 = vld [vmem:[#allocation8] sm:$0xff]
    %v76 = vld [vmem:[%s5] sm:$0xff]
    %v77 = vsub.f32 %v71, %v72
    %v78 = vsub.f32 0.0, %v77
    %v79 = vmax.f32 %v78, 0.0
    %v80 = vand.u32 2147483647, %v77
    %v81 = vsub.f32 0.0, %v80
    %v82 = vmul.f32 %v81, 1.442695
    %v83 = vpow.pop %v82
    %v84 = vadd.f32 %v83, 1.0
    %v85 = vlog2.pop %v84
    %v86 = vmul.f32 %v85, 0.6931472
    %v87 = vmul.f32 -0.5, %v83
    %v88 = vadd.f32 %v87, 1.0
    %v89 = vmul.f32 %v88, %v83
    %v90 = vand.u32 2147483647, %v83
    %vm91 = vcmp.lt.f32.partialorder %v90, 0.0004427343
    %v92 = vsel %vm91, %v89, %v86
    %v93 = vadd.f32 %v79, %v92
    %v94 = vmul.f32 %v75, %v76
    %v95 = vmul.f32 %v94, %v93
    %v96 = vadd.f32 %v73, %v77
    %v97 = vmax.f32 %v96, 0.0
    %v98 = vmul.f32 %v96, %v75
    %v99 = vsub.f32 %v97, %v98
    %v100 = vand.u32 2147483647, %v96
    %v101 = vsub.f32 0.0, %v100
    %v102 = vmul.f32 %v101, 1.442695
    %v103 = vpow.pop %v102
    %v104 = vadd.f32 %v103, 1.0
    %v105 = vlog2.pop %v104
    %v106 = vmul.f32 %v105, 0.6931472
    %v107 = vmul.f32 -0.5, %v103
    %v108 = vadd.f32 %v107, 1.0
    %v109 = vmul.f32 %v108, %v103
    %v110 = vand.u32 2147483647, %v103
    %vm111 = vcmp.lt.f32.partialorder %v110, 0.0004427343
    %v112 = vsel %vm111, %v109, %v106
    %v113 = vadd.f32 %v99, %v112
    %v114 = vadd.f32 %v95, %v113
    %v115 = vadd.f32 %v74, %v77
    %v116 = vmax.f32 %v115, 0.0
    %v117 = vmul.f32 %v115, %v76
    %v118 = vsub.f32 %v116, %v117
    %v119 = vand.u32 2147483647, %v115
    %v120 = vsub.f32 0.0, %v119
    %v121 = vmul.f32 %v120, 1.442695
    %v122 = vpow.pop %v121
    %v123 = vadd.f32 %v122, 1.0
    %v124 = vlog2.pop %v123
    %v125 = vmul.f32 %v124, 0.6931472
    %v126 = vmul.f32 -0.5, %v122
    %v127 = vadd.f32 %v126, 1.0
    %v128 = vmul.f32 %v127, %v122
    %v129 = vand.u32 2147483647, %v122
    %vm130 = vcmp.lt.f32.partialorder %v129, 0.0004427343
    %v131 = vsel %vm130, %v128, %v125
    %v132 = vadd.f32 %v118, %v131
    %v133 = vadd.f32 %v114, %v132
    %134 = vst [vmem:[#allocation10] sm:$0xff] %v133
    // Predicated region
    $region42: #{tpu_custom_call.1} parent=1 // pred_check
      _
    $region43: #{tpu_custom_call.1} parent=1 // pred_check_branch
      %136 = sbr.rel (0) target = $region45
    $region44: #{tpu_custom_call.1} parent=1 // pred_region
      %s138 = ssub.s32 128, 128
      %139 = vsyncadd [#allocation4], %s138
      %s141 = sshll.u32 [#allocation10], 4
      %s142 = int_to_ptr.vmem [resolvable:$true] %s141
      %144 = dma.vmem_to_hbm [thread:$0]  %s142, 128, %s6, [#allocation4]
    $region45: #{tpu_custom_call.1} parent=1 // pred_fallthru
      _
    // Predicated region
    $region46: #{tpu_custom_call.1} parent=1 // pred_check
      _
    $region47: #{tpu_custom_call.1} parent=1 // pred_check_branch
      %146 = sbr.rel (0) target = $region49
    $region48: #{tpu_custom_call.1} parent=1 // pred_region
      %147 = dma.done [#allocation4], 128
    $region49: #{tpu_custom_call.1} parent=1 // pred_fallthru
      _
    %148 = vsyncpa [#allocation3], 1
    %149 = vsyncpa [#allocation6], 1
    %150 = vsyncpa [#allocation9], 1
    %151 = vsyncpa [#allocation4], 1

</llo_original>
